<compile_context>
chip_gen: v5e
topology: v5e:2x2
jax: 0.10.0
libtpu: 0.0.40
codegen_flags: <defaults>
</compile_context>

<pallas_src>
import jax
import jax.numpy as jnp
from jax.experimental import pallas as pl
from jax.experimental.pallas import tpu as pltpu


_LANE = 128     # vreg lane width  -> feature dims padded per layer to a multiple of this
_SUBLANE = 8    # vreg sublane     -> batch padded to a multiple of this


def _round_up(x, m):
    return ((x + m - 1) // m) * m


def _vmem_capacity_bytes():
    """Per-generation physical VMEM (128 MiB v5e/v6e, 64 MiB v7x), with a safe fallback."""
    try:
        info = pltpu.get_tpu_info()
        cap = int(getattr(info, "vmem_capacity_bytes", 0))
        if cap > 0:
            return cap
    except Exception:
        pass
    return 64 * 1024 * 1024   # conservative (v7x-sized) default


def _choose_tm(batch):
    """Padding-aware batch tile: largest tile with <=25% padded rows; keep >=2 tiles so the
    'parallel' batch axis can be split across v7x's two TensorCores."""
    b8 = _round_up(max(batch, 1), _SUBLANE)
    want_two_tiles = b8 >= 2 * _SUBLANE
    for tm in (512, 256, 128, 64, 32, 16, 8):
        if tm > b8:
            continue
        bp = _round_up(b8, tm)
        if want_two_tiles and bp // tm < 2:
            continue
        if bp - b8 > max(b8 // 4, 0):
            continue
        return tm, bp
    return _SUBLANE, b8   # unreachable in practice (tm=8 always qualifies)


def _make_kernel(n_layers, in_widths, out_widths):
    """Kernel over one batch tile; all layer weights/biases are VMEM-resident refs.

    Args (in order): x_ref (TM, in_widths[0]) bf16,
                     w_0..w_{L-1} (in_w, out_w) bf16, b_0..b_{L-1} (1, out_w) f32,
                     o_ref (TM, out_widths[-1]) f32,
                     h_ref (TM, max intermediate width) bf16 scratch (resident activation).
    """
    def kernel(x_ref, *rest):
        w_refs = rest[:n_layers]
        b_refs = rest[n_layers:2 * n_layers]
        o_ref = rest[2 * n_layers]
        h_ref = rest[2 * n_layers + 1]
        for l in range(n_layers):                       # static -> unrolled for the scheduler
            src = x_ref[...] if l == 0 else h_ref[:, :in_widths[l]]
            y = jnp.dot(src, w_refs[l][...], preferred_element_type=jnp.float32)
            y = y + b_refs[l][...]
            if l < n_layers - 1:
                h_ref[:, :out_widths[l]] = jnp.maximum(y, 0.0).astype(h_ref.dtype)
            else:
                o_ref[...] = y.astype(o_ref.dtype)
    return kernel


def pack_mlp_params(params):
    """One-time pre-pack (hoisted out of the forward path).

    Pads each layer's (in, out) independently to multiples of 128, casts weights to bf16
    for the MXU and keeps biases in f32. Zero padding + zero bias + ReLU preserves the
    zero-column invariant between layers.
    """
    n = len(params)
    in_dims = [int(w.shape[0]) for w, _ in params]
    out_dims = [int(w.shape[1]) for w, _ in params]
    for l in range(n - 1):
        assert out_dims[l] == in_dims[l + 1], "layer widths must chain"
    in_w = tuple(_round_up(d, _LANE) for d in in_dims)
    out_w = tuple(_round_up(d, _LANE) for d in out_dims)

    ws, bs = [], []
    for l, (w, b) in enumerate(params):
        b = jnp.asarray(b).reshape(1, -1)
        ws.append(jnp.pad(w, ((0, in_w[l] - w.shape[0]),
                              (0, out_w[l] - w.shape[1]))).astype(jnp.bfloat16))
        bs.append(jnp.pad(b, ((0, 0), (0, out_w[l] - b.shape[1]))).astype(jnp.float32))

    meta = dict(n_layers=n, in_dim=in_dims[0], out_dim=out_dims[-1],
                in_widths=in_w, out_widths=out_w)
    return tuple(ws), tuple(bs), meta


def mlp_forward(x, packed):
    """Fused Pallas forward; matches MLPModel.forward (Linear+ReLU)*(num_layers+1) + Linear."""
    ws, bs, meta = packed
    n_layers = meta["n_layers"]
    in_w, out_w = meta["in_widths"], meta["out_widths"]
    B, in_dim = x.shape
    assert in_dim == meta["in_dim"]

    # Resident activation scratch spans the widest intermediate (all == hidden for this module).
    scratch_w = max((out_w[l] for l in range(n_layers - 1)), default=_LANE)

    cap = _vmem_capacity_bytes()
    hard_cap = cap * 7 // 8                      # ~112 MiB v5e/v6e, ~56 MiB v7x

    # Single-buffered resident parameters (bf16 weights, f32 biases; (1, W) pads to 8 sublanes).
    resident = (sum(int(w.size) * 2 for w in ws)
                + sum(_SUBLANE * int(b.shape[-1]) * 4 for b in bs))
    if resident > hard_cap:
        # TODO(synk): tiled (M, N, K) fallback for weights that exceed per-chip VMEM.
        raise NotImplementedError(
            "resident weight stack (%d B) exceeds the VMEM budget (%d B); "
            "needs the tiled fallback path" % (resident, hard_cap))

    TM, Bp = _choose_tm(B)

    def _need(tm):
        return (resident
                + 2 * tm * in_w[0] * 2          # double-buffered bf16 input tiles
                + 2 * tm * out_w[-1] * 4        # double-buffered f32 output tiles
                + tm * scratch_w * 2)           # resident activation scratch (bf16)

    while TM > _SUBLANE and _need(TM) > hard_cap:
        TM //= 2
        Bp = _round_up(_round_up(B, _SUBLANE), TM)

    vmem_limit = int(min(max(_need(TM) * 5 // 4 + (4 << 20), 32 << 20), hard_cap))

    x_p = jnp.pad(x, ((0, Bp - B), (0, in_w[0] - in_dim))).astype(jnp.bfloat16)

    kernel = _make_kernel(n_layers, in_w, out_w)

    out_p = pl.pallas_call(
        kernel,
        out_shape=jax.ShapeDtypeStruct((Bp, out_w[-1]), jnp.float32),
        grid_spec=pltpu.PrefetchScalarGridSpec(
            num_scalar_prefetch=0,
            grid=(Bp // TM,),
            in_specs=(
                [pl.BlockSpec((TM, in_w[0]), lambda i: (i, 0))]            # per-tile activations
                + [pl.BlockSpec(memory_space=pltpu.MemorySpace.VMEM)]      # weights: resident,
                * n_layers                                                 #   single-buffered
                + [pl.BlockSpec(memory_space=pltpu.MemorySpace.VMEM)]      # biases: resident
                * n_layers
            ),
            out_specs=pl.BlockSpec((TM, out_w[-1]), lambda i: (i, 0)),     # narrow f32 output
            scratch_shapes=[pltpu.VMEM((TM, scratch_w), jnp.bfloat16)],
        ),
        compiler_params=pltpu.CompilerParams(
            dimension_semantics=("parallel",),   # lets v7x shard batch tiles over its 2 TCs
            vmem_limit_bytes=vmem_limit,
        ),
    )(x_p, *ws, *bs)

    return out_p[:B, :meta["out_dim"]]


def init_mlp_params(key, num_layers, input_size, hidden_size, output_size):
    """Deterministic init mimicking nn.Linear default (uniform +/- 1/sqrt(fan_in))."""
    layer_dims = [(input_size, hidden_size)]
    for _ in range(num_layers):
        layer_dims.append((hidden_size, hidden_size))
    layer_dims.append((hidden_size, output_size))

    params = []
    for (fan_in, fan_out) in layer_dims:
        key, kw, kb = jax.random.split(key, 3)
        bound = 1.0 / (fan_in ** 0.5)
        w = jax.random.uniform(kw, (fan_in, fan_out), jnp.float32, -bound, bound)
        b = jax.random.uniform(kb, (1, fan_out), jnp.float32, -bound, bound)
        params.append((w, b))
    return params


def mlp_reference_bf16(x, params):
    """Plain-JAX reference doing the same math as the kernel (bf16 operands, f32 accum)."""
    n = len(params)
    h = x.astype(jnp.bfloat16)
    for i, (w, b) in enumerate(params):
        y = jnp.dot(h, w.astype(jnp.bfloat16), preferred_element_type=jnp.float32) + b
        if i < n - 1:
            h = jnp.maximum(y, 0.0).astype(jnp.bfloat16)
        else:
            h = y
    return h


def mlp_reference_f32(x, params):
    """Full-precision reference of the module semantics."""
    n = len(params)
    h = x
    for i, (w, b) in enumerate(params):
        h = h @ w + b
        if i < n - 1:
            h = jnp.maximum(h, 0.0)
    return h


if __name__ == "__main__":
    # Small, module-consistent shapes.
    num_layers = 2
    input_size = 16
    hidden_size = 32
    output_size = 8
    batch = 8

    key = jax.random.PRNGKey(0)
    key, kx = jax.random.split(key)
    x = jax.random.normal(kx, (batch, input_size), jnp.float32)

    params = init_mlp_params(key, num_layers, input_size, hidden_size, output_size)
    packed = pack_mlp_params(params)          # one-time pre-pack, hoisted out of forward

    out = jax.block_until_ready(mlp_forward(x, packed))

    ref16 = mlp_reference_bf16(x, params)     # same math as kernel -> tight tolerance
    ref32 = mlp_reference_f32(x, params)      # module semantics    -> bf16-level tolerance

    assert out.shape == (batch, output_size)
    assert jnp.allclose(out, ref16, atol=1e-4, rtol=1e-4), "mismatch vs bf16-matched reference"
    assert jnp.allclose(out, ref32, atol=5e-2, rtol=5e-2), "mismatch vs f32 reference"

    print("KERNEL_OK")
</pallas_src>

<mosaic_0001>
module attributes {stable_mosaic.version = 11 : i64} {
  func.func @kernel(%arg0: i32, %arg1: memref<8x128xbf16, #tpu.memory_space<vmem>>, %arg2: memref<128x128xbf16, #tpu.memory_space<vmem>>, %arg3: memref<128x128xbf16, #tpu.memory_space<vmem>>, %arg4: memref<128x128xbf16, #tpu.memory_space<vmem>>, %arg5: memref<128x128xbf16, #tpu.memory_space<vmem>>, %arg6: memref<1x128xf32, #tpu.memory_space<vmem>>, %arg7: memref<1x128xf32, #tpu.memory_space<vmem>>, %arg8: memref<1x128xf32, #tpu.memory_space<vmem>>, %arg9: memref<1x128xf32, #tpu.memory_space<vmem>>, %arg10: memref<8x128xf32, #tpu.memory_space<vmem>>, %arg11: memref<8x128xbf16, #tpu.memory_space<vmem>>) attributes {dimension_semantics = [#tpu.dimension_semantics<parallel>], iteration_bounds = array<i64: 1>, scalar_prefetch = 0 : i64, scratch_operands = 1 : i64, tpu.core_type = #tpu.core_type<tc>, window_params = [{transform_indices = @transform_0, window_bounds = array<i64: 8, 128>}, {pipeline_mode = #tpu.pipeline_mode<synchronous>, transform_indices = @transform_1, window_bounds = array<i64: 128, 128>}, {pipeline_mode = #tpu.pipeline_mode<synchronous>, transform_indices = @transform_2, window_bounds = array<i64: 128, 128>}, {pipeline_mode = #tpu.pipeline_mode<synchronous>, transform_indices = @transform_3, window_bounds = array<i64: 128, 128>}, {pipeline_mode = #tpu.pipeline_mode<synchronous>, transform_indices = @transform_4, window_bounds = array<i64: 128, 128>}, {pipeline_mode = #tpu.pipeline_mode<synchronous>, transform_indices = @transform_5, window_bounds = array<i64: 1, 128>}, {pipeline_mode = #tpu.pipeline_mode<synchronous>, transform_indices = @transform_6, window_bounds = array<i64: 1, 128>}, {pipeline_mode = #tpu.pipeline_mode<synchronous>, transform_indices = @transform_7, window_bounds = array<i64: 1, 128>}, {pipeline_mode = #tpu.pipeline_mode<synchronous>, transform_indices = @transform_8, window_bounds = array<i64: 1, 128>}, {transform_indices = @transform_9, window_bounds = array<i64: 8, 128>}]} {
    %c0 = arith.constant 0 : index
    %c0_0 = arith.constant 0 : index
    %0 = vector.load %arg1[%c0, %c0_0] : memref<8x128xbf16, #tpu.memory_space<vmem>>, vector<8x128xbf16>
    %c0_1 = arith.constant 0 : index
    %c0_2 = arith.constant 0 : index
    %1 = vector.load %arg2[%c0_1, %c0_2] : memref<128x128xbf16, #tpu.memory_space<vmem>>, vector<128x128xbf16>
    %cst = arith.constant dense<0.000000e+00> : vector<8x128xf32>
    %2 = tpu.matmul %0, %1, %cst {dimension_numbers = #tpu.dot_dimension_numbers<[1], [0], [0], [1], [0, 0, 1, 1], [], []>} : vector<8x128xbf16>, vector<128x128xbf16>, vector<8x128xf32> -> vector<8x128xf32>
    %c0_3 = arith.constant 0 : index
    %c0_4 = arith.constant 0 : index
    %3 = vector.load %arg6[%c0_3, %c0_4] : memref<1x128xf32, #tpu.memory_space<vmem>>, vector<1x128xf32>
    %4 = vector.broadcast %3 : vector<1x128xf32> to vector<8x128xf32>
    %5 = arith.addf %2, %4 : vector<8x128xf32>
    %cst_5 = arith.constant 0.000000e+00 : f32
    %6 = vector.broadcast %cst_5 : f32 to vector<8x128xf32>
    %7 = arith.maximumf %5, %6 : vector<8x128xf32>
    %8 = arith.truncf %7 : vector<8x128xf32> to vector<8x128xbf16>
    %c0_6 = arith.constant 0 : index
    %c0_7 = arith.constant 0 : index
    %9 = vector.load %arg11[%c0_6, %c0_7] : memref<8x128xbf16, #tpu.memory_space<vmem>>, vector<8x128xbf16>
    tpu.vector_store %arg11[%c0_6, %c0_7], %8 {strides = array<i32>} : memref<8x128xbf16, #tpu.memory_space<vmem>>, vector<8x128xbf16>,
    %c0_8 = arith.constant 0 : index
    %c0_9 = arith.constant 0 : index
    %10 = vector.load %arg11[%c0_8, %c0_9] : memref<8x128xbf16, #tpu.memory_space<vmem>>, vector<8x128xbf16>
    %c0_10 = arith.constant 0 : index
    %c0_11 = arith.constant 0 : index
    %11 = vector.load %arg3[%c0_10, %c0_11] : memref<128x128xbf16, #tpu.memory_space<vmem>>, vector<128x128xbf16>
    %cst_12 = arith.constant dense<0.000000e+00> : vector<8x128xf32>
    %12 = tpu.matmul %10, %11, %cst_12 {dimension_numbers = #tpu.dot_dimension_numbers<[1], [0], [0], [1], [0, 0, 1, 1], [], []>} : vector<8x128xbf16>, vector<128x128xbf16>, vector<8x128xf32> -> vector<8x128xf32>
    %c0_13 = arith.constant 0 : index
    %c0_14 = arith.constant 0 : index
    %13 = vector.load %arg7[%c0_13, %c0_14] : memref<1x128xf32, #tpu.memory_space<vmem>>, vector<1x128xf32>
    %14 = vector.broadcast %13 : vector<1x128xf32> to vector<8x128xf32>
    %15 = arith.addf %12, %14 : vector<8x128xf32>
    %cst_15 = arith.constant 0.000000e+00 : f32
    %16 = vector.broadcast %cst_15 : f32 to vector<8x128xf32>
    %17 = arith.maximumf %15, %16 : vector<8x128xf32>
    %18 = arith.truncf %17 : vector<8x128xf32> to vector<8x128xbf16>
    %c0_16 = arith.constant 0 : index
    %c0_17 = arith.constant 0 : index
    %19 = vector.load %arg11[%c0_16, %c0_17] : memref<8x128xbf16, #tpu.memory_space<vmem>>, vector<8x128xbf16>
    tpu.vector_store %arg11[%c0_16, %c0_17], %18 {strides = array<i32>} : memref<8x128xbf16, #tpu.memory_space<vmem>>, vector<8x128xbf16>,
    %c0_18 = arith.constant 0 : index
    %c0_19 = arith.constant 0 : index
    %20 = vector.load %arg11[%c0_18, %c0_19] : memref<8x128xbf16, #tpu.memory_space<vmem>>, vector<8x128xbf16>
    %c0_20 = arith.constant 0 : index
    %c0_21 = arith.constant 0 : index
    %21 = vector.load %arg4[%c0_20, %c0_21] : memref<128x128xbf16, #tpu.memory_space<vmem>>, vector<128x128xbf16>
    %cst_22 = arith.constant dense<0.000000e+00> : vector<8x128xf32>
    %22 = tpu.matmul %20, %21, %cst_22 {dimension_numbers = #tpu.dot_dimension_numbers<[1], [0], [0], [1], [0, 0, 1, 1], [], []>} : vector<8x128xbf16>, vector<128x128xbf16>, vector<8x128xf32> -> vector<8x128xf32>
    %c0_23 = arith.constant 0 : index
    %c0_24 = arith.constant 0 : index
    %23 = vector.load %arg8[%c0_23, %c0_24] : memref<1x128xf32, #tpu.memory_space<vmem>>, vector<1x128xf32>
    %24 = vector.broadcast %23 : vector<1x128xf32> to vector<8x128xf32>
    %25 = arith.addf %22, %24 : vector<8x128xf32>
    %cst_25 = arith.constant 0.000000e+00 : f32
    %26 = vector.broadcast %cst_25 : f32 to vector<8x128xf32>
    %27 = arith.maximumf %25, %26 : vector<8x128xf32>
    %28 = arith.truncf %27 : vector<8x128xf32> to vector<8x128xbf16>
    %c0_26 = arith.constant 0 : index
    %c0_27 = arith.constant 0 : index
    %29 = vector.load %arg11[%c0_26, %c0_27] : memref<8x128xbf16, #tpu.memory_space<vmem>>, vector<8x128xbf16>
    tpu.vector_store %arg11[%c0_26, %c0_27], %28 {strides = array<i32>} : memref<8x128xbf16, #tpu.memory_space<vmem>>, vector<8x128xbf16>,
    %c0_28 = arith.constant 0 : index
    %c0_29 = arith.constant 0 : index
    %30 = vector.load %arg11[%c0_28, %c0_29] : memref<8x128xbf16, #tpu.memory_space<vmem>>, vector<8x128xbf16>
    %c0_30 = arith.constant 0 : index
    %c0_31 = arith.constant 0 : index
    %31 = vector.load %arg5[%c0_30, %c0_31] : memref<128x128xbf16, #tpu.memory_space<vmem>>, vector<128x128xbf16>
    %cst_32 = arith.constant dense<0.000000e+00> : vector<8x128xf32>
    %32 = tpu.matmul %30, %31, %cst_32 {dimension_numbers = #tpu.dot_dimension_numbers<[1], [0], [0], [1], [0, 0, 1, 1], [], []>} : vector<8x128xbf16>, vector<128x128xbf16>, vector<8x128xf32> -> vector<8x128xf32>
    %c0_33 = arith.constant 0 : index
    %c0_34 = arith.constant 0 : index
    %33 = vector.load %arg9[%c0_33, %c0_34] : memref<1x128xf32, #tpu.memory_space<vmem>>, vector<1x128xf32>
    %34 = vector.broadcast %33 : vector<1x128xf32> to vector<8x128xf32>
    %35 = arith.addf %32, %34 : vector<8x128xf32>
    %c0_35 = arith.constant 0 : index
    %c0_36 = arith.constant 0 : index
    %36 = vector.load %arg10[%c0_35, %c0_36] : memref<8x128xf32, #tpu.memory_space<vmem>>, vector<8x128xf32>
    tpu.vector_store %arg10[%c0_35, %c0_36], %35 {strides = array<i32>} : memref<8x128xf32, #tpu.memory_space<vmem>>, vector<8x128xf32>,
    return
  }
  func.func @transform_0(%arg0: i32) -> (i32, i32) {
    %c0_i32 = arith.constant 0 : i32
    %c0_i32_0 = arith.constant 0 : i32
    return %arg0, %c0_i32 : i32, i32
  }
  func.func @transform_1(%arg0: i32) -> (i32, i32) {
    %c0_i32 = arith.constant 0 : i32
    %c0_i32_0 = arith.constant 0 : i32
    %c0_i32_1 = arith.constant 0 : i32
    return %c0_i32, %c0_i32_0 : i32, i32
  }
  func.func @transform_2(%arg0: i32) -> (i32, i32) {
    %c0_i32 = arith.constant 0 : i32
    %c0_i32_0 = arith.constant 0 : i32
    %c0_i32_1 = arith.constant 0 : i32
    return %c0_i32, %c0_i32_0 : i32, i32
  }
  func.func @transform_3(%arg0: i32) -> (i32, i32) {
    %c0_i32 = arith.constant 0 : i32
    %c0_i32_0 = arith.constant 0 : i32
    %c0_i32_1 = arith.constant 0 : i32
    return %c0_i32, %c0_i32_0 : i32, i32
  }
  func.func @transform_4(%arg0: i32) -> (i32, i32) {
    %c0_i32 = arith.constant 0 : i32
    %c0_i32_0 = arith.constant 0 : i32
    %c0_i32_1 = arith.constant 0 : i32
    return %c0_i32, %c0_i32_0 : i32, i32
  }
  func.func @transform_5(%arg0: i32) -> (i32, i32) {
    %c0_i32 = arith.constant 0 : i32
    %c0_i32_0 = arith.constant 0 : i32
    %c0_i32_1 = arith.constant 0 : i32
    return %c0_i32, %c0_i32_0 : i32, i32
  }
  func.func @transform_6(%arg0: i32) -> (i32, i32) {
    %c0_i32 = arith.constant 0 : i32
    %c0_i32_0 = arith.constant 0 : i32
    %c0_i32_1 = arith.constant 0 : i32
    return %c0_i32, %c0_i32_0 : i32, i32
  }
  func.func @transform_7(%arg0: i32) -> (i32, i32) {
    %c0_i32 = arith.constant 0 : i32
    %c0_i32_0 = arith.constant 0 : i32
    %c0_i32_1 = arith.constant 0 : i32
    return %c0_i32, %c0_i32_0 : i32, i32
  }
  func.func @transform_8(%arg0: i32) -> (i32, i32) {
    %c0_i32 = arith.constant 0 : i32
    %c0_i32_0 = arith.constant 0 : i32
    %c0_i32_1 = arith.constant 0 : i32
    return %c0_i32, %c0_i32_0 : i32, i32
  }
  func.func @transform_9(%arg0: i32) -> (i32, i32) {
    %c0_i32 = arith.constant 0 : i32
    %c0_i32_0 = arith.constant 0 : i32
    return %arg0, %c0_i32 : i32, i32
  }
}

</mosaic_0001>

<llo_original>
// kernel: tpu_custom_call.1
$region0: #{tpu_custom_call.1}
  #allocation0 [shape = 'u32[]', space=smem, size = 0x4, offset = 0x4, fixed_abs, tag = 'smem constant byte address 0x4 - core index']
  #allocation1 [shape = 'u32[72,128]{1,0:T(1,128)}', space=vmem, size = 0x9000, scoped, tag = 'internal scratch']
  #allocation2 [shape = 'bf16[8,128]{1,0:T(8,128)(2,1)}', space=vmem, size = 0x800, scoped, tag = 'scratch operand']
  %s0 = inlined_call_operand.hbm [shape: bf16[8,128], index: 0, kind: input, shape index: {}]
  %s1 = inlined_call_operand.hbm [shape: bf16[128,128], index: 1, kind: input, shape index: {}]
  %s2 = inlined_call_operand.hbm [shape: bf16[128,128], index: 2, kind: input, shape index: {}]
  %s3 = inlined_call_operand.hbm [shape: bf16[128,128], index: 3, kind: input, shape index: {}]
  %s4 = inlined_call_operand.hbm [shape: bf16[128,128], index: 4, kind: input, shape index: {}]
  %s5 = inlined_call_operand.vmem [shape: f32[1,128], index: 5, kind: input, shape index: {}]
  %s6 = inlined_call_operand.vmem [shape: f32[1,128], index: 6, kind: input, shape index: {}]
  %s7 = inlined_call_operand.vmem [shape: f32[1,128], index: 7, kind: input, shape index: {}]
  %s8 = inlined_call_operand.vmem [shape: f32[1,128], index: 8, kind: input, shape index: {}]
  %s9 = inlined_call_operand.hbm [shape: f32[8,128], index: 9, kind: output, shape index: {}]
  %s10 = sld [smem:[#allocation0]]
  $region66: #{tpu_custom_call.1} parent=0
    _
  %s12 = ssub.s32 1, %s10
  %s13 = scalar_select 0, %s12, %s10
  $region1: #{tpu_custom_call.1} parent=0
    #allocation3 [shape = 'u8[2048]{0}', space=vmem, size = 0x800, scoped, tag = 'input window, operand 0, single buffered']
    #allocation4 [shape = 's32[1]{0}', space=sflag, size = 0x4, scoped, tag = 'scoped memory for tpu_custom_call.1']
    #allocation5 [shape = 's32[1]{0}', space=sflag, size = 0x4, scoped, tag = 'scoped memory for tpu_custom_call.1']
    #allocation6 [shape = 'u8[32768]{0}', space=vmem, size = 0x8000, scoped, tag = 'input window, operand 1, single buffered']
    #allocation7 [shape = 's32[1]{0}', space=sflag, size = 0x4, scoped, tag = 'scoped memory for tpu_custom_call.1']
    #allocation8 [shape = 'u8[32768]{0}', space=vmem, size = 0x8000, scoped, tag = 'input window, operand 2, single buffered']
    #allocation9 [shape = 'u8[32768]{0}', space=vmem, size = 0x8000, scoped, tag = 'input window, operand 3, single buffered']
    #allocation10 [shape = 's32[1]{0}', space=sflag, size = 0x4, scoped, tag = 'scoped memory for tpu_custom_call.1']
    #allocation11 [shape = 'u8[32768]{0}', space=vmem, size = 0x8000, scoped, tag = 'input window, operand 4, single buffered']
    #allocation12 [shape = 'u8[4096]{0}', space=vmem, size = 0x1000, scoped, tag = 'output window, operand 0, single buffered']
    %14 = vsyncpa [#allocation4], 0
    %15 = vsyncpa [#allocation7], 0
    %16 = vsyncpa [#allocation10], 0
    %17 = vsyncpa [#allocation5], 0
    // Predicated region
    $region2: #{tpu_custom_call.1} parent=1 // pred_check
      _
    $region3: #{tpu_custom_call.1} parent=1 // pred_check_branch
      %19 = sbr.rel (0) target = $region5
    $region4: #{tpu_custom_call.1} parent=1 // pred_region
      %21 = vsyncadd [#allocation4], 0
      %s23 = sshll.u32 %s0, 4
      %s24 = int_to_ptr.hbm [resolvable:$true] %s23
      %s25 = sshll.u32 [#allocation3], 4
      %s26 = int_to_ptr.vmem [resolvable:$true] %s25
      %28 = dma.hbm_to_vmem [thread:$0]  %s24, 64, %s26, [#allocation4]
    $region5: #{tpu_custom_call.1} parent=1 // pred_fallthru
      _
    // Predicated region
    $region6: #{tpu_custom_call.1} parent=1 // pred_check
      _
    $region7: #{tpu_custom_call.1} parent=1 // pred_check_branch
      %30 = sbr.rel (0) target = $region9
    $region8: #{tpu_custom_call.1} parent=1 // pred_region
      %32 = vsyncadd [#allocation7], 0
      %s33 = sshll.u32 %s1, 4
      %s34 = int_to_ptr.hbm [resolvable:$true] %s33
      %s35 = sshll.u32 [#allocation6], 4
      %s36 = int_to_ptr.vmem [resolvable:$true] %s35
      %41 = dma.hbm_to_vmem [thread:$0]  %s34, 1024, %s36, [#allocation7], 64, 64, 4
    $region9: #{tpu_custom_call.1} parent=1 // pred_fallthru
      _
    // Predicated region
    $region10: #{tpu_custom_call.1} parent=1 // pred_check
      _
    $region11: #{tpu_custom_call.1} parent=1 // pred_check_branch
      %43 = sbr.rel (0) target = $region13
    $region12: #{tpu_custom_call.1} parent=1 // pred_region
      %45 = vsyncadd [#allocation7], 0
      %s46 = sshll.u32 %s2, 4
      %s47 = int_to_ptr.hbm [resolvable:$true] %s46
      %s48 = sshll.u32 [#allocation8], 4
      %s49 = int_to_ptr.vmem [resolvable:$true] %s48
      %54 = dma.hbm_to_vmem [thread:$0]  %s47, 1024, %s49, [#allocation7], 64, 64, 4
    $region13: #{tpu_custom_call.1} parent=1 // pred_fallthru
      _
    // Predicated region
    $region14: #{tpu_custom_call.1} parent=1 // pred_check
      _
    $region15: #{tpu_custom_call.1} parent=1 // pred_check_branch
      %56 = sbr.rel (0) target = $region17
    $region16: #{tpu_custom_call.1} parent=1 // pred_region
      %58 = vsyncadd [#allocation10], 0
      %s59 = sshll.u32 %s3, 4
      %s60 = int_to_ptr.hbm [resolvable:$true] %s59
      %s61 = sshll.u32 [#allocation9], 4
      %s62 = int_to_ptr.vmem [resolvable:$true] %s61
      %67 = dma.hbm_to_vmem [thread:$0]  %s60, 1024, %s62, [#allocation10], 64, 64, 4
    $region17: #{tpu_custom_call.1} parent=1 // pred_fallthru
      _
    // Predicated region
    $region18: #{tpu_custom_call.1} parent=1 // pred_check
      _
    $region19: #{tpu_custom_call.1} parent=1 // pred_check_branch
      %69 = sbr.rel (0) target = $region21
    $region20: #{tpu_custom_call.1} parent=1 // pred_region
      %71 = vsyncadd [#allocation10], 0
      %s72 = sshll.u32 %s4, 4
      %s73 = int_to_ptr.hbm [resolvable:$true] %s72
      %s74 = sshll.u32 [#allocation11], 4
      %s75 = int_to_ptr.vmem [resolvable:$true] %s74
      %80 = dma.hbm_to_vmem [thread:$0]  %s73, 1024, %s75, [#allocation10], 64, 64, 4
    $region21: #{tpu_custom_call.1} parent=1 // pred_fallthru
      _
    // Predicated region
    $region22: #{tpu_custom_call.1} parent=1 // pred_check
      _
    $region23: #{tpu_custom_call.1} parent=1 // pred_check_branch
      %82 = sbr.rel (0) target = $region25
    $region24: #{tpu_custom_call.1} parent=1 // pred_region
      _
    $region25: #{tpu_custom_call.1} parent=1 // pred_fallthru
      _
    // Predicated region
    $region26: #{tpu_custom_call.1} parent=1 // pred_check
      _
    $region27: #{tpu_custom_call.1} parent=1 // pred_check_branch
      %84 = sbr.rel (0) target = $region29
    $region28: #{tpu_custom_call.1} parent=1 // pred_region
      _
    $region29: #{tpu_custom_call.1} parent=1 // pred_fallthru
      _
    // Predicated region
    $region30: #{tpu_custom_call.1} parent=1 // pred_check
      _
    $region31: #{tpu_custom_call.1} parent=1 // pred_check_branch
      %86 = sbr.rel (0) target = $region33
    $region32: #{tpu_custom_call.1} parent=1 // pred_region
      _
    $region33: #{tpu_custom_call.1} parent=1 // pred_fallthru
      _
    // Predicated region
    $region34: #{tpu_custom_call.1} parent=1 // pred_check
      _
    $region35: #{tpu_custom_call.1} parent=1 // pred_check_branch
      %88 = sbr.rel (0) target = $region37
    $region36: #{tpu_custom_call.1} parent=1 // pred_region
      _
    $region37: #{tpu_custom_call.1} parent=1 // pred_fallthru
      _
    // Predicated region
    $region38: #{tpu_custom_call.1} parent=1 // pred_check
      _
    $region39: #{tpu_custom_call.1} parent=1 // pred_check_branch
      %90 = sbr.rel (0) target = $region41
    $region40: #{tpu_custom_call.1} parent=1 // pred_region
      %92 = dma.done [#allocation4], 64
    $region41: #{tpu_custom_call.1} parent=1 // pred_fallthru
      _
    // Predicated region
    $region42: #{tpu_custom_call.1} parent=1 // pred_check
      _
    $region43: #{tpu_custom_call.1} parent=1 // pred_check_branch
      %94 = sbr.rel (0) target = $region45
    $region44: #{tpu_custom_call.1} parent=1 // pred_region
      %96 = dma.done [#allocation7], 1024
    $region45: #{tpu_custom_call.1} parent=1 // pred_fallthru
      _
    // Predicated region
    $region46: #{tpu_custom_call.1} parent=1 // pred_check
      _
    $region47: #{tpu_custom_call.1} parent=1 // pred_check_branch
      %98 = sbr.rel (0) target = $region49
    $region48: #{tpu_custom_call.1} parent=1 // pred_region
      %100 = dma.done [#allocation7], 1024
    $region49: #{tpu_custom_call.1} parent=1 // pred_fallthru
      _
    // Predicated region
    $region50: #{tpu_custom_call.1} parent=1 // pred_check
      _
    $region51: #{tpu_custom_call.1} parent=1 // pred_check_branch
      %102 = sbr.rel (0) target = $region53
    $region52: #{tpu_custom_call.1} parent=1 // pred_region
      %104 = dma.done [#allocation10], 1024
    $region53: #{tpu_custom_call.1} parent=1 // pred_fallthru
      _
    // Predicated region
    $region54: #{tpu_custom_call.1} parent=1 // pred_check
      _
    $region55: #{tpu_custom_call.1} parent=1 // pred_check_branch
      %106 = sbr.rel (0) target = $region57
    $region56: #{tpu_custom_call.1} parent=1 // pred_region
      %108 = dma.done [#allocation10], 1024
    $region57: #{tpu_custom_call.1} parent=1 // pred_fallthru
      _
    %v109 = vld [vmem:[#allocation3] sm:$0xf]
    %v110 = vld [vmem:[#allocation6] sm:$0xf]
    %v111 = vld [vmem:[#allocation6 + $0x4] sm:$0xf]
    %v112 = vld [vmem:[#allocation6 + $0x8] sm:$0xf]
    %v113 = vld [vmem:[#allocation6 + $0xc] sm:$0xf]
    %v114 = vld [vmem:[#allocation6 + $0x10] sm:$0xf]
    %v115 = vld [vmem:[#allocation6 + $0x14] sm:$0xf]
    %v116 = vld [vmem:[#allocation6 + $0x18] sm:$0xf]
    %v117 = vld [vmem:[#allocation6 + $0x1c] sm:$0xf]
    %v118 = vld [vmem:[#allocation6 + $0x20] sm:$0xf]
    %v119 = vld [vmem:[#allocation6 + $0x24] sm:$0xf]
    %v120 = vld [vmem:[#allocation6 + $0x28] sm:$0xf]
    %v121 = vld [vmem:[#allocation6 + $0x2c] sm:$0xf]
    %v122 = vld [vmem:[#allocation6 + $0x30] sm:$0xf]
    %v123 = vld [vmem:[#allocation6 + $0x34] sm:$0xf]
    %v124 = vld [vmem:[#allocation6 + $0x38] sm:$0xf]
    %v125 = vld [vmem:[#allocation6 + $0x3c] sm:$0xf]
    %v126 = vld [vmem:[%s5] sm:$0x1]
    %v128 = vperm.slane %v126, 0
    %v146 = vunpack.c.l.b16 %v110
    %v147 = vunpack.c.l.b16 %v111
    %v148 = vunpack.c.l.b16 %v112
    %v149 = vunpack.c.l.b16 %v113
    %v150 = vunpack.c.l.b16 %v114
    %v151 = vunpack.c.l.b16 %v115
    %v152 = vunpack.c.l.b16 %v116
    %v153 = vunpack.c.l.b16 %v117
    %v154 = vunpack.c.l.b16 %v118
    %v155 = vunpack.c.l.b16 %v119
    %v156 = vunpack.c.l.b16 %v120
    %v157 = vunpack.c.l.b16 %v121
    %v158 = vunpack.c.l.b16 %v122
    %v159 = vunpack.c.l.b16 %v123
    %v160 = vunpack.c.l.b16 %v124
    %v161 = vunpack.c.l.b16 %v125
    %v162 = vpack.c.b16 %v147, %v146
    %v163 = vpack.c.b16 %v149, %v148
    %v164 = vpack.c.b16 %v151, %v150
    %v165 = vpack.c.b16 %v153, %v152
    %v166 = vpack.c.b16 %v155, %v154
    %v167 = vpack.c.b16 %v157, %v156
    %v168 = vpack.c.b16 %v159, %v158
    %v169 = vpack.c.b16 %v161, %v160
    %178 = vmatpush.bf16.msra.mxu0 %v169
    %179 = vmatpush.bf16.msra.mxu0 %v168
    %180 = vmatpush.bf16.msra.mxu0 %v167
    %181 = vmatpush.bf16.msra.mxu0 %v166
    %182 = vmatpush.bf16.msra.mxu0 %v165
    %183 = vmatpush.bf16.msra.mxu0 %v164
    %184 = vmatpush.bf16.msra.mxu0 %v163
    %185 = vmatpush.bf16.msra.mxu0 %v162
    %186 = vmatmul.bf16.gmra.mxu0 %v109
    %v187 = vpop.f32.mrf.mxu0
    %v188 = vadd.f32 %v128, %v187
    %v189 = vpop.f32.mrf.mxu0
    %190 = vdwg.mxu0
    %v191 = vmax.f32 %v188, 0.0
    %v192 = vpack.c.bf16 %v191, %v191
    %193 = vst [vmem:[#allocation2] sm:$0xf] %v192
    %v194 = vld [vmem:[#allocation2] sm:$0xf]
    %v195 = vld [vmem:[#allocation8] sm:$0xf]
    %v196 = vld [vmem:[#allocation8 + $0x4] sm:$0xf]
    %v197 = vld [vmem:[#allocation8 + $0x8] sm:$0xf]
    %v198 = vld [vmem:[#allocation8 + $0xc] sm:$0xf]
    %v199 = vld [vmem:[#allocation8 + $0x10] sm:$0xf]
    %v200 = vld [vmem:[#allocation8 + $0x14] sm:$0xf]
    %v201 = vld [vmem:[#allocation8 + $0x18] sm:$0xf]
    %v202 = vld [vmem:[#allocation8 + $0x1c] sm:$0xf]
    %v203 = vld [vmem:[#allocation8 + $0x20] sm:$0xf]
    %v204 = vld [vmem:[#allocation8 + $0x24] sm:$0xf]
    %v205 = vld [vmem:[#allocation8 + $0x28] sm:$0xf]
    %v206 = vld [vmem:[#allocation8 + $0x2c] sm:$0xf]
    %v207 = vld [vmem:[#allocation8 + $0x30] sm:$0xf]
    %v208 = vld [vmem:[#allocation8 + $0x34] sm:$0xf]
    %v209 = vld [vmem:[#allocation8 + $0x38] sm:$0xf]
    %v210 = vld [vmem:[#allocation8 + $0x3c] sm:$0xf]
    %v211 = vld [vmem:[%s6] sm:$0x1]
    %v213 = vperm.slane %v211, 0
    %v231 = vunpack.c.l.b16 %v195
    %v232 = vunpack.c.l.b16 %v196
    %v233 = vunpack.c.l.b16 %v197
    %v234 = vunpack.c.l.b16 %v198
    %v235 = vunpack.c.l.b16 %v199
    %v236 = vunpack.c.l.b16 %v200
    %v237 = vunpack.c.l.b16 %v201
    %v238 = vunpack.c.l.b16 %v202
    %v239 = vunpack.c.l.b16 %v203
    %v240 = vunpack.c.l.b16 %v204
    %v241 = vunpack.c.l.b16 %v205
    %v242 = vunpack.c.l.b16 %v206
    %v243 = vunpack.c.l.b16 %v207
    %v244 = vunpack.c.l.b16 %v208
    %v245 = vunpack.c.l.b16 %v209
    %v246 = vunpack.c.l.b16 %v210
    %v247 = vpack.c.b16 %v232, %v231
    %v248 = vpack.c.b16 %v234, %v233
    %v249 = vpack.c.b16 %v236, %v235
    %v250 = vpack.c.b16 %v238, %v237
    %v251 = vpack.c.b16 %v240, %v239
    %v252 = vpack.c.b16 %v242, %v241
    %v253 = vpack.c.b16 %v244, %v243
    %v254 = vpack.c.b16 %v246, %v245
    %263 = vmatpush.bf16.msra.mxu0 %v254
    %264 = vmatpush.bf16.msra.mxu0 %v253
    %265 = vmatpush.bf16.msra.mxu0 %v252
    %266 = vmatpush.bf16.msra.mxu0 %v251
    %267 = vmatpush.bf16.msra.mxu0 %v250
    %268 = vmatpush.bf16.msra.mxu0 %v249
    %269 = vmatpush.bf16.msra.mxu0 %v248
    %270 = vmatpush.bf16.msra.mxu0 %v247
    %271 = vmatmul.bf16.gmra.mxu0 %v194
    %v272 = vpop.f32.mrf.mxu0
    %v273 = vadd.f32 %v213, %v272
    %v274 = vpop.f32.mrf.mxu0
    %275 = vdwg.mxu0
    %v276 = vmax.f32 %v273, 0.0
    %v277 = vpack.c.bf16 %v276, %v276
    %278 = vst [vmem:[#allocation2] sm:$0xf] %v277
    %v279 = vld [vmem:[#allocation2] sm:$0xf]
    %v280 = vld [vmem:[#allocation9] sm:$0xf]
    %v281 = vld [vmem:[#allocation9 + $0x4] sm:$0xf]
    %v282 = vld [vmem:[#allocation9 + $0x8] sm:$0xf]
    %v283 = vld [vmem:[#allocation9 + $0xc] sm:$0xf]
    %v284 = vld [vmem:[#allocation9 + $0x10] sm:$0xf]
    %v285 = vld [vmem:[#allocation9 + $0x14] sm:$0xf]
    %v286 = vld [vmem:[#allocation9 + $0x18] sm:$0xf]
    %v287 = vld [vmem:[#allocation9 + $0x1c] sm:$0xf]
    %v288 = vld [vmem:[#allocation9 + $0x20] sm:$0xf]
    %v289 = vld [vmem:[#allocation9 + $0x24] sm:$0xf]
    %v290 = vld [vmem:[#allocation9 + $0x28] sm:$0xf]
    %v291 = vld [vmem:[#allocation9 + $0x2c] sm:$0xf]
    %v292 = vld [vmem:[#allocation9 + $0x30] sm:$0xf]
    %v293 = vld [vmem:[#allocation9 + $0x34] sm:$0xf]
    %v294 = vld [vmem:[#allocation9 + $0x38] sm:$0xf]
    %v295 = vld [vmem:[#allocation9 + $0x3c] sm:$0xf]
    %v296 = vld [vmem:[%s7] sm:$0x1]
    %v298 = vperm.slane %v296, 0
    %v316 = vunpack.c.l.b16 %v280
    %v317 = vunpack.c.l.b16 %v281
    %v318 = vunpack.c.l.b16 %v282
    %v319 = vunpack.c.l.b16 %v283
    %v320 = vunpack.c.l.b16 %v284
    %v321 = vunpack.c.l.b16 %v285
    %v322 = vunpack.c.l.b16 %v286
    %v323 = vunpack.c.l.b16 %v287
    %v324 = vunpack.c.l.b16 %v288
    %v325 = vunpack.c.l.b16 %v289
    %v326 = vunpack.c.l.b16 %v290
    %v327 = vunpack.c.l.b16 %v291
    %v328 = vunpack.c.l.b16 %v292
    %v329 = vunpack.c.l.b16 %v293
    %v330 = vunpack.c.l.b16 %v294
    %v331 = vunpack.c.l.b16 %v295
    %v332 = vpack.c.b16 %v317, %v316
    %v333 = vpack.c.b16 %v319, %v318
    %v334 = vpack.c.b16 %v321, %v320
    %v335 = vpack.c.b16 %v323, %v322
    %v336 = vpack.c.b16 %v325, %v324
    %v337 = vpack.c.b16 %v327, %v326
    %v338 = vpack.c.b16 %v329, %v328
    %v339 = vpack.c.b16 %v331, %v330
    %348 = vmatpush.bf16.msra.mxu0 %v339
    %349 = vmatpush.bf16.msra.mxu0 %v338
    %350 = vmatpush.bf16.msra.mxu0 %v337
    %351 = vmatpush.bf16.msra.mxu0 %v336
    %352 = vmatpush.bf16.msra.mxu0 %v335
    %353 = vmatpush.bf16.msra.mxu0 %v334
    %354 = vmatpush.bf16.msra.mxu0 %v333
    %355 = vmatpush.bf16.msra.mxu0 %v332
    %356 = vmatmul.bf16.gmra.mxu0 %v279
    %v357 = vpop.f32.mrf.mxu0
    %v358 = vadd.f32 %v298, %v357
    %v359 = vpop.f32.mrf.mxu0
    %360 = vdwg.mxu0
    %v361 = vmax.f32 %v358, 0.0
    %v362 = vpack.c.bf16 %v361, %v361
    %363 = vst [vmem:[#allocation2] sm:$0xf] %v362
    %v364 = vld [vmem:[#allocation2] sm:$0xf]
    %v365 = vld [vmem:[#allocation11] sm:$0xf]
    %v366 = vld [vmem:[#allocation11 + $0x4] sm:$0xf]
    %v367 = vld [vmem:[#allocation11 + $0x8] sm:$0xf]
    %v368 = vld [vmem:[#allocation11 + $0xc] sm:$0xf]
    %v369 = vld [vmem:[#allocation11 + $0x10] sm:$0xf]
    %v370 = vld [vmem:[#allocation11 + $0x14] sm:$0xf]
    %v371 = vld [vmem:[#allocation11 + $0x18] sm:$0xf]
    %v372 = vld [vmem:[#allocation11 + $0x1c] sm:$0xf]
    %v373 = vld [vmem:[#allocation11 + $0x20] sm:$0xf]
    %v374 = vld [vmem:[#allocation11 + $0x24] sm:$0xf]
    %v375 = vld [vmem:[#allocation11 + $0x28] sm:$0xf]
    %v376 = vld [vmem:[#allocation11 + $0x2c] sm:$0xf]
    %v377 = vld [vmem:[#allocation11 + $0x30] sm:$0xf]
    %v378 = vld [vmem:[#allocation11 + $0x34] sm:$0xf]
    %v379 = vld [vmem:[#allocation11 + $0x38] sm:$0xf]
    %v380 = vld [vmem:[#allocation11 + $0x3c] sm:$0xf]
    %v381 = vld [vmem:[%s8] sm:$0x1]
    %v383 = vperm.slane %v381, 0
    %v401 = vunpack.c.l.b16 %v365
    %v402 = vunpack.c.l.b16 %v366
    %v403 = vunpack.c.l.b16 %v367
    %v404 = vunpack.c.l.b16 %v368
    %v405 = vunpack.c.l.b16 %v369
    %v406 = vunpack.c.l.b16 %v370
    %v407 = vunpack.c.l.b16 %v371
    %v408 = vunpack.c.l.b16 %v372
    %v409 = vunpack.c.l.b16 %v373
    %v410 = vunpack.c.l.b16 %v374
    %v411 = vunpack.c.l.b16 %v375
    %v412 = vunpack.c.l.b16 %v376
    %v413 = vunpack.c.l.b16 %v377
    %v414 = vunpack.c.l.b16 %v378
    %v415 = vunpack.c.l.b16 %v379
    %v416 = vunpack.c.l.b16 %v380
    %v417 = vpack.c.b16 %v402, %v401
    %v418 = vpack.c.b16 %v404, %v403
    %v419 = vpack.c.b16 %v406, %v405
    %v420 = vpack.c.b16 %v408, %v407
    %v421 = vpack.c.b16 %v410, %v409
    %v422 = vpack.c.b16 %v412, %v411
    %v423 = vpack.c.b16 %v414, %v413
    %v424 = vpack.c.b16 %v416, %v415
    %433 = vmatpush.bf16.msra.mxu0 %v424
    %434 = vmatpush.bf16.msra.mxu0 %v423
    %435 = vmatpush.bf16.msra.mxu0 %v422
    %436 = vmatpush.bf16.msra.mxu0 %v421
    %437 = vmatpush.bf16.msra.mxu0 %v420
    %438 = vmatpush.bf16.msra.mxu0 %v419
    %439 = vmatpush.bf16.msra.mxu0 %v418
    %440 = vmatpush.bf16.msra.mxu0 %v417
    %441 = vmatmul.bf16.gmra.mxu0 %v364
    %v442 = vpop.f32.mrf.mxu0
    %v443 = vadd.f32 %v383, %v442
    %v444 = vpop.f32.mrf.mxu0
    %445 = vdwg.mxu0
    %446 = vst [vmem:[#allocation12] sm:$0xff] %v443
    // Predicated region
    $region58: #{tpu_custom_call.1} parent=1 // pred_check
      _
    $region59: #{tpu_custom_call.1} parent=1 // pred_check_branch
      %448 = sbr.rel (0) target = $region61
    $region60: #{tpu_custom_call.1} parent=1 // pred_region
      %450 = vsyncadd [#allocation5], 0
      %s452 = sshll.u32 [#allocation12], 4
      %s453 = int_to_ptr.vmem [resolvable:$true] %s452
      %s454 = sshll.u32 %s9, 4
      %s455 = int_to_ptr.hbm [resolvable:$true] %s454
      %457 = dma.vmem_to_hbm [thread:$0]  %s453, 128, %s455, [#allocation5]
    $region61: #{tpu_custom_call.1} parent=1 // pred_fallthru
      _
    // Predicated region
    $region62: #{tpu_custom_call.1} parent=1 // pred_check
      _
    $region63: #{tpu_custom_call.1} parent=1 // pred_check_branch
      %459 = sbr.rel (0) target = $region65
    $region64: #{tpu_custom_call.1} parent=1 // pred_region
      %461 = dma.done [#allocation5], 128
    $region65: #{tpu_custom_call.1} parent=1 // pred_fallthru
      _
    %462 = vsyncpa [#allocation4], 1
    %463 = vsyncpa [#allocation7], 1
    %464 = vsyncpa [#allocation10], 1
    %465 = vsyncpa [#allocation5], 1

</llo_original>
